<compile_context>
chip_gen: v7x
topology: tpu7x:2x2x1
jax: 0.10.0
libtpu: 0.0.40
codegen_flags: <defaults>
</compile_context>

<pallas_src>
import functools

import jax
import jax.numpy as jnp
from jax.experimental import pallas as pl
from jax.experimental.pallas import tpu as pltpu


def char_cnn_kernel(ids_ref, w_ref, b_ref, o_ref, oh_ref, *,
                    kernel_size, chunk_words, t_out):
    """One tile of words.

    ids_ref: (TILE, C_pad)              int32 char ids
    w_ref:   ((K+1)*V_pad, 2F) bf16     block-banded pair weights (VMEM resident)
    b_ref:   (1, F) f32                 conv bias
    o_ref:   (TILE, F) f32              relu(max_t conv1d(embed(ids)))
    oh_ref:  (cw, C_pad*V_pad) bf16     per-chunk one-hot scratch
    """
    tile_words, c_pad = ids_ref.shape
    k_sz = kernel_size
    kv_rows, two_f = w_ref.shape
    v_pad = kv_rows // (k_sz + 1)
    f = two_f // 2
    cw = chunk_words
    n_chunks = tile_words // cw

    # Pair starts are even => slab window offsets are multiples of 2*V_pad = 128 lanes.
    pair_starts = list(range(0, t_out, 2))

    # Hoisted loop invariants.
    iota_v = jax.lax.broadcasted_iota(jnp.int32, (cw, v_pad), 1)      # (cw, V_pad)
    bias = b_ref[...]                                                 # (1, F) f32

    def chunk_body(ci, carry):
        row0 = pl.multiple_of(ci * cw, cw)

        # One ids load per chunk; build the lane-dense one-hot slab in VMEM.
        ids = ids_ref[pl.ds(row0, cw), :]                             # (cw, C_pad) i32
        for c in range(c_pad):
            oh_ref[:, c * v_pad:(c + 1) * v_pad] = (
                ids[:, c:c + 1] == iota_v).astype(jnp.bfloat16)

        w_pair = w_ref[...]                                           # (256, 128) bf16

        # Running max over time, kept at full 2F width; halves folded once below.
        m2 = jnp.full((cw, two_f), -jnp.inf, dtype=jnp.float32)
        m_tail = None
        for s in pair_starts:
            window = oh_ref[:, s * v_pad:(s + k_sz + 1) * v_pad]      # (cw,(K+1)*V_pad)
            res = jnp.dot(window, w_pair,
                          preferred_element_type=jnp.float32)         # (cw, 2F) f32
            if s + 1 < t_out:
                m2 = jnp.maximum(m2, res)                             # both halves valid
            else:
                m_tail = res[:, :f]                                   # only first half real

        m_run = jnp.maximum(m2[:, :f], m2[:, f:])
        if m_tail is not None:
            m_run = jnp.maximum(m_run, m_tail)

        out = jnp.maximum(m_run + bias, 0.0)                          # bias after max, ReLU
        o_ref[pl.ds(row0, cw), :] = out.astype(o_ref.dtype)
        return carry

    jax.lax.fori_loop(0, n_chunks, chunk_body, 0)
    # TODO(synk): dropout omitted (identity at inference; no RNG state requested).


def _round_up(x, m):
    return ((x + m - 1) // m) * m


def char_cnn_embedding(char_ids, emb_table, conv_w, conv_b, *, kernel_size,
                       word_tile=512, chunk_words=128):
    """char_ids: (B, W, C) int32; returns (B, W, F) float32."""
    b, n_words, c = char_ids.shape
    v, e = emb_table.shape
    f = conv_w.shape[0]
    k_sz = int(kernel_size)
    assert c >= k_sz, "need at least kernel_size chars per word"
    assert conv_w.shape == (f, e, k_sz)
    t_out = c - k_sz + 1

    # ---- fold the (tiny) embedding table into the conv taps ----------------
    # tap_w[k, v, :] = emb_table[v, :] @ conv_w[:, :, k].T ; padding_idx row (0)
    # of the table is zero so padded chars contribute nothing, as in the module.
    v_pad = max(8, int(pl.next_power_of_2(int(v))))
    table_p = jnp.zeros((v_pad, e), jnp.float32).at[:v].set(
        emb_table.astype(jnp.float32))
    tap_w = jnp.einsum("ve,fek->kvf", table_p, conv_w.astype(jnp.float32),
                       precision=jax.lax.Precision.HIGHEST)           # (K, V_pad, F)
    w_cat = tap_w.reshape(k_sz * v_pad, f)                            # (K*V_pad, F)

    # Block-banded pair weight: one matmul evaluates conv time-steps (s, s+1):
    #   rows [0 : K*V_pad)        , cols [0 : F)  -> output at time s
    #   rows [V_pad : (K+1)*V_pad), cols [F : 2F) -> output at time s+1
    w_pair = jnp.zeros(((k_sz + 1) * v_pad, 2 * f), jnp.float32)
    w_pair = w_pair.at[:k_sz * v_pad, :f].set(w_cat)
    w_pair = w_pair.at[v_pad:, f:].set(w_cat)
    # bf16 MXU operands (~3x over emulated f32 matmul); the one-hot LHS is exactly
    # 0/1 in bf16, so the only approximation is bf16 rounding of w_pair (~2^-9 rel).
    w_pair = w_pair.astype(jnp.bfloat16)
    bias = conv_b.astype(jnp.float32).reshape(1, f)

    # ---- flatten words; pad chars so the last pair window always fits -------
    n = b * n_words
    flat_ids = char_ids.reshape(n, c).astype(jnp.int32)
    c_pad = c if (t_out % 2 == 0) else c + 1       # odd t_out: last pair half-valid
    if c_pad != c:
        flat_ids = jnp.pad(flat_ids, ((0, 0), (0, c_pad - c)))        # id 0 = pad char

    # ---- word tiling: chunk (inner fori_loop) x tile (grid) -----------------
    chunk_words = max(8, (min(int(chunk_words), _round_up(n, 8)) // 8) * 8)
    num_chunks = _round_up(n, chunk_words) // chunk_words
    max_tile_chunks = max(1, int(word_tile) // chunk_words)
    # Aim for >= 8 grid steps when there is enough work so v7x's two TensorCores
    # both get tiles; total VMEM footprint is <1 MiB, so bigger tiles buy nothing.
    tile_chunks = max(1, min(max_tile_chunks, num_chunks // 8))
    tile = tile_chunks * chunk_words
    n_pad = _round_up(n, tile)
    if n_pad != n:
        flat_ids = jnp.pad(flat_ids, ((0, n_pad - n), (0, 0)))        # pad words use id 0
    grid = (n_pad // tile,)

    num_pairs = (t_out + 1) // 2
    cost = pl.CostEstimate(
        flops=2 * n_pad * num_pairs * ((k_sz + 1) * v_pad) * (2 * f),
        transcendentals=0,
        bytes_accessed=(n_pad * c_pad * 4 + n_pad * f * 4
                        + w_pair.size * 2 + bias.size * 4),
    )

    out = pl.pallas_call(
        functools.partial(char_cnn_kernel, kernel_size=k_sz,
                          chunk_words=chunk_words, t_out=t_out),
        out_shape=jax.ShapeDtypeStruct((n_pad, f), jnp.float32),
        grid=grid,
        in_specs=[
            pl.BlockSpec((tile, c_pad), lambda i: (i, 0)),                 # char ids
            pl.BlockSpec(((k_sz + 1) * v_pad, 2 * f), lambda i: (0, 0)),   # pair weights (resident)
            pl.BlockSpec((1, f), lambda i: (0, 0)),                        # bias (resident)
        ],
        out_specs=pl.BlockSpec((tile, f), lambda i: (i, 0)),
        scratch_shapes=[pltpu.VMEM((chunk_words, c_pad * v_pad), jnp.bfloat16)],
        compiler_params=pltpu.CompilerParams(
            dimension_semantics=("parallel",)),
        cost_estimate=cost,
    )(flat_ids, w_pair, bias)

    return out[:n].reshape(b, n_words, f)


def reference(char_ids, emb_table, conv_w, conv_b, *, kernel_size):
    """Pure-JAX reference matching the PyTorch forward (eval mode)."""
    b, w, c = char_ids.shape
    f = conv_w.shape[0]
    emb = jnp.take(emb_table, char_ids.reshape(b * w, c), axis=0)     # (N, C, E)
    x = jnp.transpose(emb, (0, 2, 1))                                 # (N, E, C)
    y = jax.lax.conv_general_dilated(
        x, conv_w, window_strides=(1,), padding="VALID",
        dimension_numbers=("NCH", "OIH", "NCH"),
        precision=jax.lax.Precision.HIGHEST)                          # (N, F, T)
    y = y + conv_b.reshape(1, f, 1)
    y = jnp.max(y, axis=2)                                            # (N, F)
    y = y.reshape(b, w, f)
    return jnp.maximum(y, 0.0)


if __name__ == "__main__":
    # Module hyper-params (small, shapes consistent with the forward pass).
    num_embeddings = 50
    embedding_dim = 32     # E
    num_filters = 64       # F
    kernel_size = 3        # K
    padding_idx = 0

    batch = 2              # B
    max_num_words = 8      # W
    max_num_chars = 16     # C

    key = jax.random.PRNGKey(0)
    k_emb, k_w, k_b, k_x = jax.random.split(key, 4)

    emb_table = jax.random.normal(k_emb, (num_embeddings, embedding_dim),
                                  jnp.float32) * 0.1
    emb_table = emb_table.at[padding_idx].set(0.0)   # padding_idx row is zero

    conv_w = jax.random.normal(
        k_w, (num_filters, embedding_dim, kernel_size), jnp.float32) * 0.1
    conv_b = jax.random.normal(k_b, (num_filters,), jnp.float32) * 0.1

    char_ids = jax.random.randint(
        k_x, (batch, max_num_words, max_num_chars), 0, num_embeddings,
        dtype=jnp.int32)

    out = char_cnn_embedding(char_ids, emb_table, conv_w, conv_b,
                             kernel_size=kernel_size)
    out = jax.block_until_ready(out)

    ref = reference(char_ids, emb_table, conv_w, conv_b,
                    kernel_size=kernel_size)
    assert out.shape == (batch, max_num_words, num_filters)
    # Tolerance loosened vs. the f32-weight version: the pair weights are bf16 on
    # the MXU (one-hot side is exact), so per-output error is bounded by bf16
    # rounding of K summed taps (~1e-3 here).
    assert jnp.allclose(out, ref, rtol=1e-2, atol=1e-2), "mismatch vs reference"

    print("KERNEL_OK")
</pallas_src>

<mosaic_0001>
module attributes {stable_mosaic.version = 11 : i64} {
  func.func @char_cnn_kernel(%arg0: i32, %arg1: memref<16x16xi32, #tpu.memory_space<vmem>>, %arg2: memref<256x128xbf16, #tpu.memory_space<vmem>>, %arg3: memref<1x64xf32, #tpu.memory_space<vmem>>, %arg4: memref<16x64xf32, #tpu.memory_space<vmem>>, %arg5: memref<16x1024xbf16, #tpu.memory_space<vmem>>) attributes {dimension_semantics = [#tpu.dimension_semantics<parallel>], iteration_bounds = array<i64: 1>, scalar_prefetch = 0 : i64, scratch_operands = 1 : i64, tpu.core_type = #tpu.core_type<tc>, window_params = [{transform_indices = @transform_0, window_bounds = array<i64: 16, 16>}, {pipeline_mode = #tpu.pipeline_mode<synchronous>, transform_indices = @transform_1, window_bounds = array<i64: 256, 128>}, {pipeline_mode = #tpu.pipeline_mode<synchronous>, transform_indices = @transform_2, window_bounds = array<i64: 1, 64>}, {transform_indices = @transform_3, window_bounds = array<i64: 16, 64>}]} {
    %0 = tpu.iota {dimensions = array<i32: 1>} : vector<16x64xi32>
    %c0 = arith.constant 0 : index
    %c0_0 = arith.constant 0 : index
    %1 = vector.load %arg3[%c0, %c0_0] : memref<1x64xf32, #tpu.memory_space<vmem>>, vector<1x64xf32>
    %c0_i32 = arith.constant 0 : i32
    %c16_i32 = arith.constant 16 : i32
    %2 = arith.muli %c0_i32, %c16_i32 : i32
    %3 = tpu.assume_multiple %2, 16 : i32
    %4 = arith.index_cast %3 : i32 to index
    %c0_1 = arith.constant 0 : index
    %5 = vector.load %arg1[%4, %c0_1] : memref<16x16xi32, #tpu.memory_space<vmem>>, vector<16x16xi32>
    %6 = vector.extract_strided_slice %5 {offsets = [0, 0], sizes = [16, 1], strides = [1, 1]} : vector<16x16xi32> to vector<16x1xi32>
    %7 = vector.broadcast %6 : vector<16x1xi32> to vector<16x64xi32>
    %8 = arith.cmpi eq, %7, %0 : vector<16x64xi32>
    %9 = arith.extui %8 : vector<16x64xi1> to vector<16x64xi32>
    %10 = arith.sitofp %9 : vector<16x64xi32> to vector<16x64xf32>
    %11 = arith.truncf %10 : vector<16x64xf32> to vector<16x64xbf16>
    %c0_2 = arith.constant 0 : index
    %c0_3 = arith.constant 0 : index
    %12 = vector.load %arg5[%c0_2, %c0_3] : memref<16x1024xbf16, #tpu.memory_space<vmem>>, vector<16x64xbf16>
    tpu.vector_store %arg5[%c0_2, %c0_3], %11 {strides = array<i32>} : memref<16x1024xbf16, #tpu.memory_space<vmem>>, vector<16x64xbf16>,
    %13 = vector.extract_strided_slice %5 {offsets = [0, 1], sizes = [16, 1], strides = [1, 1]} : vector<16x16xi32> to vector<16x1xi32>
    %14 = vector.broadcast %13 : vector<16x1xi32> to vector<16x64xi32>
    %15 = arith.cmpi eq, %14, %0 : vector<16x64xi32>
    %16 = arith.extui %15 : vector<16x64xi1> to vector<16x64xi32>
    %17 = arith.sitofp %16 : vector<16x64xi32> to vector<16x64xf32>
    %18 = arith.truncf %17 : vector<16x64xf32> to vector<16x64xbf16>
    %c0_4 = arith.constant 0 : index
    %c64 = arith.constant 64 : index
    %19 = vector.load %arg5[%c0_4, %c64] : memref<16x1024xbf16, #tpu.memory_space<vmem>>, vector<16x64xbf16>
    tpu.vector_store %arg5[%c0_4, %c64], %18 {strides = array<i32>} : memref<16x1024xbf16, #tpu.memory_space<vmem>>, vector<16x64xbf16>,
    %20 = vector.extract_strided_slice %5 {offsets = [0, 2], sizes = [16, 1], strides = [1, 1]} : vector<16x16xi32> to vector<16x1xi32>
    %21 = vector.broadcast %20 : vector<16x1xi32> to vector<16x64xi32>
    %22 = arith.cmpi eq, %21, %0 : vector<16x64xi32>
    %23 = arith.extui %22 : vector<16x64xi1> to vector<16x64xi32>
    %24 = arith.sitofp %23 : vector<16x64xi32> to vector<16x64xf32>
    %25 = arith.truncf %24 : vector<16x64xf32> to vector<16x64xbf16>
    %c0_5 = arith.constant 0 : index
    %c128 = arith.constant 128 : index
    %26 = vector.load %arg5[%c0_5, %c128] : memref<16x1024xbf16, #tpu.memory_space<vmem>>, vector<16x64xbf16>
    tpu.vector_store %arg5[%c0_5, %c128], %25 {strides = array<i32>} : memref<16x1024xbf16, #tpu.memory_space<vmem>>, vector<16x64xbf16>,
    %27 = vector.extract_strided_slice %5 {offsets = [0, 3], sizes = [16, 1], strides = [1, 1]} : vector<16x16xi32> to vector<16x1xi32>
    %28 = vector.broadcast %27 : vector<16x1xi32> to vector<16x64xi32>
    %29 = arith.cmpi eq, %28, %0 : vector<16x64xi32>
    %30 = arith.extui %29 : vector<16x64xi1> to vector<16x64xi32>
    %31 = arith.sitofp %30 : vector<16x64xi32> to vector<16x64xf32>
    %32 = arith.truncf %31 : vector<16x64xf32> to vector<16x64xbf16>
    %c0_6 = arith.constant 0 : index
    %c192 = arith.constant 192 : index
    %33 = vector.load %arg5[%c0_6, %c192] : memref<16x1024xbf16, #tpu.memory_space<vmem>>, vector<16x64xbf16>
    tpu.vector_store %arg5[%c0_6, %c192], %32 {strides = array<i32>} : memref<16x1024xbf16, #tpu.memory_space<vmem>>, vector<16x64xbf16>,
    %34 = vector.extract_strided_slice %5 {offsets = [0, 4], sizes = [16, 1], strides = [1, 1]} : vector<16x16xi32> to vector<16x1xi32>
    %35 = vector.broadcast %34 : vector<16x1xi32> to vector<16x64xi32>
    %36 = arith.cmpi eq, %35, %0 : vector<16x64xi32>
    %37 = arith.extui %36 : vector<16x64xi1> to vector<16x64xi32>
    %38 = arith.sitofp %37 : vector<16x64xi32> to vector<16x64xf32>
    %39 = arith.truncf %38 : vector<16x64xf32> to vector<16x64xbf16>
    %c0_7 = arith.constant 0 : index
    %c256 = arith.constant 256 : index
    %40 = vector.load %arg5[%c0_7, %c256] : memref<16x1024xbf16, #tpu.memory_space<vmem>>, vector<16x64xbf16>
    tpu.vector_store %arg5[%c0_7, %c256], %39 {strides = array<i32>} : memref<16x1024xbf16, #tpu.memory_space<vmem>>, vector<16x64xbf16>,
    %41 = vector.extract_strided_slice %5 {offsets = [0, 5], sizes = [16, 1], strides = [1, 1]} : vector<16x16xi32> to vector<16x1xi32>
    %42 = vector.broadcast %41 : vector<16x1xi32> to vector<16x64xi32>
    %43 = arith.cmpi eq, %42, %0 : vector<16x64xi32>
    %44 = arith.extui %43 : vector<16x64xi1> to vector<16x64xi32>
    %45 = arith.sitofp %44 : vector<16x64xi32> to vector<16x64xf32>
    %46 = arith.truncf %45 : vector<16x64xf32> to vector<16x64xbf16>
    %c0_8 = arith.constant 0 : index
    %c320 = arith.constant 320 : index
    %47 = vector.load %arg5[%c0_8, %c320] : memref<16x1024xbf16, #tpu.memory_space<vmem>>, vector<16x64xbf16>
    tpu.vector_store %arg5[%c0_8, %c320], %46 {strides = array<i32>} : memref<16x1024xbf16, #tpu.memory_space<vmem>>, vector<16x64xbf16>,
    %48 = vector.extract_strided_slice %5 {offsets = [0, 6], sizes = [16, 1], strides = [1, 1]} : vector<16x16xi32> to vector<16x1xi32>
    %49 = vector.broadcast %48 : vector<16x1xi32> to vector<16x64xi32>
    %50 = arith.cmpi eq, %49, %0 : vector<16x64xi32>
    %51 = arith.extui %50 : vector<16x64xi1> to vector<16x64xi32>
    %52 = arith.sitofp %51 : vector<16x64xi32> to vector<16x64xf32>
    %53 = arith.truncf %52 : vector<16x64xf32> to vector<16x64xbf16>
    %c0_9 = arith.constant 0 : index
    %c384 = arith.constant 384 : index
    %54 = vector.load %arg5[%c0_9, %c384] : memref<16x1024xbf16, #tpu.memory_space<vmem>>, vector<16x64xbf16>
    tpu.vector_store %arg5[%c0_9, %c384], %53 {strides = array<i32>} : memref<16x1024xbf16, #tpu.memory_space<vmem>>, vector<16x64xbf16>,
    %55 = vector.extract_strided_slice %5 {offsets = [0, 7], sizes = [16, 1], strides = [1, 1]} : vector<16x16xi32> to vector<16x1xi32>
    %56 = vector.broadcast %55 : vector<16x1xi32> to vector<16x64xi32>
    %57 = arith.cmpi eq, %56, %0 : vector<16x64xi32>
    %58 = arith.extui %57 : vector<16x64xi1> to vector<16x64xi32>
    %59 = arith.sitofp %58 : vector<16x64xi32> to vector<16x64xf32>
    %60 = arith.truncf %59 : vector<16x64xf32> to vector<16x64xbf16>
    %c0_10 = arith.constant 0 : index
    %c448 = arith.constant 448 : index
    %61 = vector.load %arg5[%c0_10, %c448] : memref<16x1024xbf16, #tpu.memory_space<vmem>>, vector<16x64xbf16>
    tpu.vector_store %arg5[%c0_10, %c448], %60 {strides = array<i32>} : memref<16x1024xbf16, #tpu.memory_space<vmem>>, vector<16x64xbf16>,
    %62 = vector.extract_strided_slice %5 {offsets = [0, 8], sizes = [16, 1], strides = [1, 1]} : vector<16x16xi32> to vector<16x1xi32>
    %63 = vector.broadcast %62 : vector<16x1xi32> to vector<16x64xi32>
    %64 = arith.cmpi eq, %63, %0 : vector<16x64xi32>
    %65 = arith.extui %64 : vector<16x64xi1> to vector<16x64xi32>
    %66 = arith.sitofp %65 : vector<16x64xi32> to vector<16x64xf32>
    %67 = arith.truncf %66 : vector<16x64xf32> to vector<16x64xbf16>
    %c0_11 = arith.constant 0 : index
    %c512 = arith.constant 512 : index
    %68 = vector.load %arg5[%c0_11, %c512] : memref<16x1024xbf16, #tpu.memory_space<vmem>>, vector<16x64xbf16>
    tpu.vector_store %arg5[%c0_11, %c512], %67 {strides = array<i32>} : memref<16x1024xbf16, #tpu.memory_space<vmem>>, vector<16x64xbf16>,
    %69 = vector.extract_strided_slice %5 {offsets = [0, 9], sizes = [16, 1], strides = [1, 1]} : vector<16x16xi32> to vector<16x1xi32>
    %70 = vector.broadcast %69 : vector<16x1xi32> to vector<16x64xi32>
    %71 = arith.cmpi eq, %70, %0 : vector<16x64xi32>
    %72 = arith.extui %71 : vector<16x64xi1> to vector<16x64xi32>
    %73 = arith.sitofp %72 : vector<16x64xi32> to vector<16x64xf32>
    %74 = arith.truncf %73 : vector<16x64xf32> to vector<16x64xbf16>
    %c0_12 = arith.constant 0 : index
    %c576 = arith.constant 576 : index
    %75 = vector.load %arg5[%c0_12, %c576] : memref<16x1024xbf16, #tpu.memory_space<vmem>>, vector<16x64xbf16>
    tpu.vector_store %arg5[%c0_12, %c576], %74 {strides = array<i32>} : memref<16x1024xbf16, #tpu.memory_space<vmem>>, vector<16x64xbf16>,
    %76 = vector.extract_strided_slice %5 {offsets = [0, 10], sizes = [16, 1], strides = [1, 1]} : vector<16x16xi32> to vector<16x1xi32>
    %77 = vector.broadcast %76 : vector<16x1xi32> to vector<16x64xi32>
    %78 = arith.cmpi eq, %77, %0 : vector<16x64xi32>
    %79 = arith.extui %78 : vector<16x64xi1> to vector<16x64xi32>
    %80 = arith.sitofp %79 : vector<16x64xi32> to vector<16x64xf32>
    %81 = arith.truncf %80 : vector<16x64xf32> to vector<16x64xbf16>
    %c0_13 = arith.constant 0 : index
    %c640 = arith.constant 640 : index
    %82 = vector.load %arg5[%c0_13, %c640] : memref<16x1024xbf16, #tpu.memory_space<vmem>>, vector<16x64xbf16>
    tpu.vector_store %arg5[%c0_13, %c640], %81 {strides = array<i32>} : memref<16x1024xbf16, #tpu.memory_space<vmem>>, vector<16x64xbf16>,
    %83 = vector.extract_strided_slice %5 {offsets = [0, 11], sizes = [16, 1], strides = [1, 1]} : vector<16x16xi32> to vector<16x1xi32>
    %84 = vector.broadcast %83 : vector<16x1xi32> to vector<16x64xi32>
    %85 = arith.cmpi eq, %84, %0 : vector<16x64xi32>
    %86 = arith.extui %85 : vector<16x64xi1> to vector<16x64xi32>
    %87 = arith.sitofp %86 : vector<16x64xi32> to vector<16x64xf32>
    %88 = arith.truncf %87 : vector<16x64xf32> to vector<16x64xbf16>
    %c0_14 = arith.constant 0 : index
    %c704 = arith.constant 704 : index
    %89 = vector.load %arg5[%c0_14, %c704] : memref<16x1024xbf16, #tpu.memory_space<vmem>>, vector<16x64xbf16>
    tpu.vector_store %arg5[%c0_14, %c704], %88 {strides = array<i32>} : memref<16x1024xbf16, #tpu.memory_space<vmem>>, vector<16x64xbf16>,
    %90 = vector.extract_strided_slice %5 {offsets = [0, 12], sizes = [16, 1], strides = [1, 1]} : vector<16x16xi32> to vector<16x1xi32>
    %91 = vector.broadcast %90 : vector<16x1xi32> to vector<16x64xi32>
    %92 = arith.cmpi eq, %91, %0 : vector<16x64xi32>
    %93 = arith.extui %92 : vector<16x64xi1> to vector<16x64xi32>
    %94 = arith.sitofp %93 : vector<16x64xi32> to vector<16x64xf32>
    %95 = arith.truncf %94 : vector<16x64xf32> to vector<16x64xbf16>
    %c0_15 = arith.constant 0 : index
    %c768 = arith.constant 768 : index
    %96 = vector.load %arg5[%c0_15, %c768] : memref<16x1024xbf16, #tpu.memory_space<vmem>>, vector<16x64xbf16>
    tpu.vector_store %arg5[%c0_15, %c768], %95 {strides = array<i32>} : memref<16x1024xbf16, #tpu.memory_space<vmem>>, vector<16x64xbf16>,
    %97 = vector.extract_strided_slice %5 {offsets = [0, 13], sizes = [16, 1], strides = [1, 1]} : vector<16x16xi32> to vector<16x1xi32>
    %98 = vector.broadcast %97 : vector<16x1xi32> to vector<16x64xi32>
    %99 = arith.cmpi eq, %98, %0 : vector<16x64xi32>
    %100 = arith.extui %99 : vector<16x64xi1> to vector<16x64xi32>
    %101 = arith.sitofp %100 : vector<16x64xi32> to vector<16x64xf32>
    %102 = arith.truncf %101 : vector<16x64xf32> to vector<16x64xbf16>
    %c0_16 = arith.constant 0 : index
    %c832 = arith.constant 832 : index
    %103 = vector.load %arg5[%c0_16, %c832] : memref<16x1024xbf16, #tpu.memory_space<vmem>>, vector<16x64xbf16>
    tpu.vector_store %arg5[%c0_16, %c832], %102 {strides = array<i32>} : memref<16x1024xbf16, #tpu.memory_space<vmem>>, vector<16x64xbf16>,
    %104 = vector.extract_strided_slice %5 {offsets = [0, 14], sizes = [16, 1], strides = [1, 1]} : vector<16x16xi32> to vector<16x1xi32>
    %105 = vector.broadcast %104 : vector<16x1xi32> to vector<16x64xi32>
    %106 = arith.cmpi eq, %105, %0 : vector<16x64xi32>
    %107 = arith.extui %106 : vector<16x64xi1> to vector<16x64xi32>
    %108 = arith.sitofp %107 : vector<16x64xi32> to vector<16x64xf32>
    %109 = arith.truncf %108 : vector<16x64xf32> to vector<16x64xbf16>
    %c0_17 = arith.constant 0 : index
    %c896 = arith.constant 896 : index
    %110 = vector.load %arg5[%c0_17, %c896] : memref<16x1024xbf16, #tpu.memory_space<vmem>>, vector<16x64xbf16>
    tpu.vector_store %arg5[%c0_17, %c896], %109 {strides = array<i32>} : memref<16x1024xbf16, #tpu.memory_space<vmem>>, vector<16x64xbf16>,
    %111 = vector.extract_strided_slice %5 {offsets = [0, 15], sizes = [16, 1], strides = [1, 1]} : vector<16x16xi32> to vector<16x1xi32>
    %112 = vector.broadcast %111 : vector<16x1xi32> to vector<16x64xi32>
    %113 = arith.cmpi eq, %112, %0 : vector<16x64xi32>
    %114 = arith.extui %113 : vector<16x64xi1> to vector<16x64xi32>
    %115 = arith.sitofp %114 : vector<16x64xi32> to vector<16x64xf32>
    %116 = arith.truncf %115 : vector<16x64xf32> to vector<16x64xbf16>
    %c0_18 = arith.constant 0 : index
    %c960 = arith.constant 960 : index
    %117 = vector.load %arg5[%c0_18, %c960] : memref<16x1024xbf16, #tpu.memory_space<vmem>>, vector<16x64xbf16>
    tpu.vector_store %arg5[%c0_18, %c960], %116 {strides = array<i32>} : memref<16x1024xbf16, #tpu.memory_space<vmem>>, vector<16x64xbf16>,
    %c0_19 = arith.constant 0 : index
    %c0_20 = arith.constant 0 : index
    %118 = vector.load %arg2[%c0_19, %c0_20] : memref<256x128xbf16, #tpu.memory_space<vmem>>, vector<256x128xbf16>
    %cst = arith.constant 0xFF800000 : f32
    %119 = vector.broadcast %cst : f32 to vector<16x128xf32>
    %c0_21 = arith.constant 0 : index
    %c0_22 = arith.constant 0 : index
    %120 = vector.load %arg5[%c0_21, %c0_22] : memref<16x1024xbf16, #tpu.memory_space<vmem>>, vector<16x256xbf16>
    %cst_23 = arith.constant dense<0.000000e+00> : vector<16x128xf32>
    %121 = tpu.matmul %120, %118, %cst_23 {dimension_numbers = #tpu.dot_dimension_numbers<[1], [0], [0], [1], [0, 0, 1, 1], [], []>} : vector<16x256xbf16>, vector<256x128xbf16>, vector<16x128xf32> -> vector<16x128xf32>
    %122 = arith.maximumf %119, %121 : vector<16x128xf32>
    %c0_24 = arith.constant 0 : index
    %c128_25 = arith.constant 128 : index
    %123 = vector.load %arg5[%c0_24, %c128_25] : memref<16x1024xbf16, #tpu.memory_space<vmem>>, vector<16x256xbf16>
    %cst_26 = arith.constant dense<0.000000e+00> : vector<16x128xf32>
    %124 = tpu.matmul %123, %118, %cst_26 {dimension_numbers = #tpu.dot_dimension_numbers<[1], [0], [0], [1], [0, 0, 1, 1], [], []>} : vector<16x256xbf16>, vector<256x128xbf16>, vector<16x128xf32> -> vector<16x128xf32>
    %125 = arith.maximumf %122, %124 : vector<16x128xf32>
    %c0_27 = arith.constant 0 : index
    %c256_28 = arith.constant 256 : index
    %126 = vector.load %arg5[%c0_27, %c256_28] : memref<16x1024xbf16, #tpu.memory_space<vmem>>, vector<16x256xbf16>
    %cst_29 = arith.constant dense<0.000000e+00> : vector<16x128xf32>
    %127 = tpu.matmul %126, %118, %cst_29 {dimension_numbers = #tpu.dot_dimension_numbers<[1], [0], [0], [1], [0, 0, 1, 1], [], []>} : vector<16x256xbf16>, vector<256x128xbf16>, vector<16x128xf32> -> vector<16x128xf32>
    %128 = arith.maximumf %125, %127 : vector<16x128xf32>
    %c0_30 = arith.constant 0 : index
    %c384_31 = arith.constant 384 : index
    %129 = vector.load %arg5[%c0_30, %c384_31] : memref<16x1024xbf16, #tpu.memory_space<vmem>>, vector<16x256xbf16>
    %cst_32 = arith.constant dense<0.000000e+00> : vector<16x128xf32>
    %130 = tpu.matmul %129, %118, %cst_32 {dimension_numbers = #tpu.dot_dimension_numbers<[1], [0], [0], [1], [0, 0, 1, 1], [], []>} : vector<16x256xbf16>, vector<256x128xbf16>, vector<16x128xf32> -> vector<16x128xf32>
    %131 = arith.maximumf %128, %130 : vector<16x128xf32>
    %c0_33 = arith.constant 0 : index
    %c512_34 = arith.constant 512 : index
    %132 = vector.load %arg5[%c0_33, %c512_34] : memref<16x1024xbf16, #tpu.memory_space<vmem>>, vector<16x256xbf16>
    %cst_35 = arith.constant dense<0.000000e+00> : vector<16x128xf32>
    %133 = tpu.matmul %132, %118, %cst_35 {dimension_numbers = #tpu.dot_dimension_numbers<[1], [0], [0], [1], [0, 0, 1, 1], [], []>} : vector<16x256xbf16>, vector<256x128xbf16>, vector<16x128xf32> -> vector<16x128xf32>
    %134 = arith.maximumf %131, %133 : vector<16x128xf32>
    %c0_36 = arith.constant 0 : index
    %c640_37 = arith.constant 640 : index
    %135 = vector.load %arg5[%c0_36, %c640_37] : memref<16x1024xbf16, #tpu.memory_space<vmem>>, vector<16x256xbf16>
    %cst_38 = arith.constant dense<0.000000e+00> : vector<16x128xf32>
    %136 = tpu.matmul %135, %118, %cst_38 {dimension_numbers = #tpu.dot_dimension_numbers<[1], [0], [0], [1], [0, 0, 1, 1], [], []>} : vector<16x256xbf16>, vector<256x128xbf16>, vector<16x128xf32> -> vector<16x128xf32>
    %137 = arith.maximumf %134, %136 : vector<16x128xf32>
    %c0_39 = arith.constant 0 : index
    %c768_40 = arith.constant 768 : index
    %138 = vector.load %arg5[%c0_39, %c768_40] : memref<16x1024xbf16, #tpu.memory_space<vmem>>, vector<16x256xbf16>
    %cst_41 = arith.constant dense<0.000000e+00> : vector<16x128xf32>
    %139 = tpu.matmul %138, %118, %cst_41 {dimension_numbers = #tpu.dot_dimension_numbers<[1], [0], [0], [1], [0, 0, 1, 1], [], []>} : vector<16x256xbf16>, vector<256x128xbf16>, vector<16x128xf32> -> vector<16x128xf32>
    %140 = arith.maximumf %137, %139 : vector<16x128xf32>
    %141 = vector.extract_strided_slice %140 {offsets = [0, 0], sizes = [16, 64], strides = [1, 1]} : vector<16x128xf32> to vector<16x64xf32>
    %142 = vector.extract_strided_slice %140 {offsets = [0, 64], sizes = [16, 64], strides = [1, 1]} : vector<16x128xf32> to vector<16x64xf32>
    %143 = arith.maximumf %141, %142 : vector<16x64xf32>
    %144 = vector.broadcast %1 : vector<1x64xf32> to vector<16x64xf32>
    %145 = arith.addf %143, %144 : vector<16x64xf32>
    %cst_42 = arith.constant 0.000000e+00 : f32
    %146 = vector.broadcast %cst_42 : f32 to vector<16x64xf32>
    %147 = arith.maximumf %145, %146 : vector<16x64xf32>
    %148 = arith.index_cast %3 : i32 to index
    %c0_43 = arith.constant 0 : index
    %149 = vector.load %arg4[%148, %c0_43] : memref<16x64xf32, #tpu.memory_space<vmem>>, vector<16x64xf32>
    tpu.vector_store %arg4[%148, %c0_43], %147 {strides = array<i32>} : memref<16x64xf32, #tpu.memory_space<vmem>>, vector<16x64xf32>,
    %c1_i32 = arith.constant 1 : i32
    return
  }
  func.func @transform_0(%arg0: i32) -> (i32, i32) {
    %c0_i32 = arith.constant 0 : i32
    %c0_i32_0 = arith.constant 0 : i32
    return %arg0, %c0_i32 : i32, i32
  }
  func.func @transform_1(%arg0: i32) -> (i32, i32) {
    %c0_i32 = arith.constant 0 : i32
    %c0_i32_0 = arith.constant 0 : i32
    %c0_i32_1 = arith.constant 0 : i32
    return %c0_i32, %c0_i32_0 : i32, i32
  }
  func.func @transform_2(%arg0: i32) -> (i32, i32) {
    %c0_i32 = arith.constant 0 : i32
    %c0_i32_0 = arith.constant 0 : i32
    %c0_i32_1 = arith.constant 0 : i32
    return %c0_i32, %c0_i32_0 : i32, i32
  }
  func.func @transform_3(%arg0: i32) -> (i32, i32) {
    %c0_i32 = arith.constant 0 : i32
    %c0_i32_0 = arith.constant 0 : i32
    return %arg0, %c0_i32 : i32, i32
  }
}

</mosaic_0001>

<llo_original>
// kernel: tpu_custom_call.1
$region0: #{tpu_custom_call.1}
  #allocation0 [shape = 'u32[]', space=smem, size = 0x4, offset = 0x4, fixed_abs, tag = 'smem constant byte address 0x4 - core index']
  #allocation1 [shape = 'u32[144,128]{1,0:T(1,128)}', space=vmem, size = 0x12000, scoped, tag = 'internal scratch']
  #allocation2 [shape = 'bf16[16,1024]{1,0:T(16,128)(2,1)}', space=vmem, size = 0x8000, scoped, tag = 'scratch operand']
  %s0 = inlined_call_operand.hbm [shape: s32[16,16], index: 0, kind: input, shape index: {}]
  %s1 = inlined_call_operand.hbm [shape: bf16[256,128], index: 1, kind: input, shape index: {}]
  %s2 = inlined_call_operand.vmem [shape: f32[1,64], index: 2, kind: input, shape index: {}]
  %s3 = inlined_call_operand.hbm [shape: f32[16,64], index: 3, kind: output, shape index: {}]
  %s4 = sld [smem:[#allocation0]]
  $region30: #{tpu_custom_call.1} parent=0
    _
  %s6 = ssub.s32 1, %s4
  %s7 = scalar_select 0, %s6, %s4
  $region1: #{tpu_custom_call.1} parent=0
    #allocation3 [shape = 'u8[8192]{0}', space=vmem, size = 0x2000, scoped, tag = 'input window, operand 0, single buffered']
    #allocation4 [shape = 's32[1]{0}', space=sflag, size = 0x4, scoped, tag = 'scoped memory for tpu_custom_call.1']
    #allocation5 [shape = 's32[1]{0}', space=sflag, size = 0x4, scoped, tag = 'scoped memory for tpu_custom_call.1']
    #allocation6 [shape = 'u8[65536]{0}', space=vmem, size = 0x10000, scoped, tag = 'input window, operand 1, single buffered']
    #allocation7 [shape = 's32[1]{0}', space=sflag, size = 0x4, scoped, tag = 'scoped memory for tpu_custom_call.1']
    #allocation8 [shape = 'u8[8192]{0}', space=vmem, size = 0x2000, scoped, tag = 'output window, operand 0, single buffered']
    %8 = vsyncpa [#allocation4], 0
    %9 = vsyncpa [#allocation7], 0
    %10 = vsyncpa [#allocation5], 0
    // Predicated region
    $region2: #{tpu_custom_call.1} parent=1 // pred_check
      _
    $region3: #{tpu_custom_call.1} parent=1 // pred_check_branch
      %12 = sbr.rel (0) target = $region5
    $region4: #{tpu_custom_call.1} parent=1 // pred_region
      %s14 = ssub.s32 256, 256
      %15 = vsyncadd [#allocation4], %s14
      %s16 = sshll.u32 [#allocation3], 4
      %s17 = int_to_ptr.vmem [resolvable:$true] %s16
      %22 = dma.hbm_to_vmem [thread:$0]  %s0, 256, %s17, [#allocation4], 128, 128, 8
    $region5: #{tpu_custom_call.1} parent=1 // pred_fallthru
      _
    // Predicated region
    $region6: #{tpu_custom_call.1} parent=1 // pred_check
      _
    $region7: #{tpu_custom_call.1} parent=1 // pred_check_branch
      %24 = sbr.rel (0) target = $region9
    $region8: #{tpu_custom_call.1} parent=1 // pred_region
      %s26 = ssub.s32 2048, 2048
      %27 = vsyncadd [#allocation7], %s26
      %s28 = sshll.u32 [#allocation6], 4
      %s29 = int_to_ptr.vmem [resolvable:$true] %s28
      %34 = dma.hbm_to_vmem [thread:$0]  %s1, 2048, %s29, [#allocation7], 64, 64, 4
    $region9: #{tpu_custom_call.1} parent=1 // pred_fallthru
      _
    // Predicated region
    $region10: #{tpu_custom_call.1} parent=1 // pred_check
      _
    $region11: #{tpu_custom_call.1} parent=1 // pred_check_branch
      %36 = sbr.rel (0) target = $region13
    $region12: #{tpu_custom_call.1} parent=1 // pred_region
      _
    $region13: #{tpu_custom_call.1} parent=1 // pred_fallthru
      _
    // Predicated region
    $region14: #{tpu_custom_call.1} parent=1 // pred_check
      _
    $region15: #{tpu_custom_call.1} parent=1 // pred_check_branch
      %38 = sbr.rel (0) target = $region17
    $region16: #{tpu_custom_call.1} parent=1 // pred_region
      %39 = dma.done [#allocation4], 256
    $region17: #{tpu_custom_call.1} parent=1 // pred_fallthru
      _
    // Predicated region
    $region18: #{tpu_custom_call.1} parent=1 // pred_check
      _
    $region19: #{tpu_custom_call.1} parent=1 // pred_check_branch
      %41 = sbr.rel (0) target = $region21
    $region20: #{tpu_custom_call.1} parent=1 // pred_region
      %42 = dma.done [#allocation7], 2048
    $region21: #{tpu_custom_call.1} parent=1 // pred_fallthru
      _
    %v44 = vlaneseq
    %v45 = vand.u32 %v44, 127
    %v46 = vld [vmem:[%s2] sm:$0x1]
    %v47 = vld [vmem:[#allocation3] sm:$0xff]
    %v48 = vld [vmem:[#allocation3 + $0x8] sm:$0xff]
    %49 = vset.pattern.permute.xlu0 0
    %50 = vperm.xlu0 %49, %v47
    %v51 = vpop.permute.xlu0 %50
    %52 = vset.pattern.permute.xlu0 0
    %53 = vperm.xlu0 %52, %v48
    %v54 = vpop.permute.xlu0 %53
    %vm55 = vcmp.eq.s32.totalorder %v51, %v45
    %vm56 = vcmp.eq.s32.totalorder %v54, %v45
    %v57 = vsel %vm55, 1, 0
    %v58 = vsel %vm56, 1, 0
    %v59 = vcvt.s32.f32 %v57
    %v60 = vcvt.s32.f32 %v58
    %v61 = vpack.c.bf16 %v60, %v59
    %vm62 = vcmask 523264
    %63 = vst.msk [vmem:[#allocation2] sm:$0xff] %vm62, %v61
    %64 = vset.pattern.permute.xlu0 1
    %65 = vperm.xlu0 %64, %v47
    %v66 = vpop.permute.xlu0 %65
    %67 = vset.pattern.permute.xlu0 1
    %68 = vperm.xlu0 %67, %v48
    %v69 = vpop.permute.xlu0 %68
    %vm70 = vcmp.eq.s32.totalorder %v66, %v45
    %vm71 = vcmp.eq.s32.totalorder %v69, %v45
    %v72 = vsel %vm70, 1, 0
    %v73 = vsel %vm71, 1, 0
    %v74 = vcvt.s32.f32 %v72
    %v75 = vcvt.s32.f32 %v73
    %v76 = vpack.c.bf16 %v75, %v74
    %78 = vrot.lane.b32.xlu0 %v76, 64
    %v79 = vpop.permute.xlu0 %78
    %vm81 = vcmask 1048064
    %82 = vst.msk [vmem:[#allocation2] sm:$0xff] %vm81, %v79
    %83 = vset.pattern.permute.xlu0 2
    %84 = vperm.xlu0 %83, %v47
    %v85 = vpop.permute.xlu0 %84
    %86 = vset.pattern.permute.xlu0 2
    %87 = vperm.xlu0 %86, %v48
    %v88 = vpop.permute.xlu0 %87
    %vm89 = vcmp.eq.s32.totalorder %v85, %v45
    %vm90 = vcmp.eq.s32.totalorder %v88, %v45
    %v91 = vsel %vm89, 1, 0
    %v92 = vsel %vm90, 1, 0
    %v93 = vcvt.s32.f32 %v91
    %v94 = vcvt.s32.f32 %v92
    %v95 = vpack.c.bf16 %v94, %v93
    %96 = vst.msk [vmem:[#allocation2 + $0x8] sm:$0xff] %vm62, %v95
    %97 = vset.pattern.permute.xlu0 3
    %98 = vperm.xlu0 %97, %v47
    %v99 = vpop.permute.xlu0 %98
    %100 = vset.pattern.permute.xlu0 3
    %101 = vperm.xlu0 %100, %v48
    %v102 = vpop.permute.xlu0 %101
    %vm103 = vcmp.eq.s32.totalorder %v99, %v45
    %vm104 = vcmp.eq.s32.totalorder %v102, %v45
    %v105 = vsel %vm103, 1, 0
    %v106 = vsel %vm104, 1, 0
    %v107 = vcvt.s32.f32 %v105
    %v108 = vcvt.s32.f32 %v106
    %v109 = vpack.c.bf16 %v108, %v107
    %111 = vrot.lane.b32.xlu0 %v109, 64
    %v112 = vpop.permute.xlu0 %111
    %114 = vst.msk [vmem:[#allocation2 + $0x8] sm:$0xff] %vm81, %v112
    %115 = vset.pattern.permute.xlu0 4
    %116 = vperm.xlu0 %115, %v47
    %v117 = vpop.permute.xlu0 %116
    %118 = vset.pattern.permute.xlu0 4
    %119 = vperm.xlu0 %118, %v48
    %v120 = vpop.permute.xlu0 %119
    %vm121 = vcmp.eq.s32.totalorder %v117, %v45
    %vm122 = vcmp.eq.s32.totalorder %v120, %v45
    %v123 = vsel %vm121, 1, 0
    %v124 = vsel %vm122, 1, 0
    %v125 = vcvt.s32.f32 %v123
    %v126 = vcvt.s32.f32 %v124
    %v127 = vpack.c.bf16 %v126, %v125
    %128 = vst.msk [vmem:[#allocation2 + $0x10] sm:$0xff] %vm62, %v127
    %129 = vset.pattern.permute.xlu0 5
    %130 = vperm.xlu0 %129, %v47
    %v131 = vpop.permute.xlu0 %130
    %132 = vset.pattern.permute.xlu0 5
    %133 = vperm.xlu0 %132, %v48
    %v134 = vpop.permute.xlu0 %133
    %vm135 = vcmp.eq.s32.totalorder %v131, %v45
    %vm136 = vcmp.eq.s32.totalorder %v134, %v45
    %v137 = vsel %vm135, 1, 0
    %v138 = vsel %vm136, 1, 0
    %v139 = vcvt.s32.f32 %v137
    %v140 = vcvt.s32.f32 %v138
    %v141 = vpack.c.bf16 %v140, %v139
    %143 = vrot.lane.b32.xlu0 %v141, 64
    %v144 = vpop.permute.xlu0 %143
    %146 = vst.msk [vmem:[#allocation2 + $0x10] sm:$0xff] %vm81, %v144
    %147 = vset.pattern.permute.xlu0 6
    %148 = vperm.xlu0 %147, %v47
    %v149 = vpop.permute.xlu0 %148
    %150 = vset.pattern.permute.xlu0 6
    %151 = vperm.xlu0 %150, %v48
    %v152 = vpop.permute.xlu0 %151
    %vm153 = vcmp.eq.s32.totalorder %v149, %v45
    %vm154 = vcmp.eq.s32.totalorder %v152, %v45
    %v155 = vsel %vm153, 1, 0
    %v156 = vsel %vm154, 1, 0
    %v157 = vcvt.s32.f32 %v155
    %v158 = vcvt.s32.f32 %v156
    %v159 = vpack.c.bf16 %v158, %v157
    %160 = vst.msk [vmem:[#allocation2 + $0x18] sm:$0xff] %vm62, %v159
    %161 = vset.pattern.permute.xlu0 7
    %162 = vperm.xlu0 %161, %v47
    %v163 = vpop.permute.xlu0 %162
    %164 = vset.pattern.permute.xlu0 7
    %165 = vperm.xlu0 %164, %v48
    %v166 = vpop.permute.xlu0 %165
    %vm167 = vcmp.eq.s32.totalorder %v163, %v45
    %vm168 = vcmp.eq.s32.totalorder %v166, %v45
    %v169 = vsel %vm167, 1, 0
    %v170 = vsel %vm168, 1, 0
    %v171 = vcvt.s32.f32 %v169
    %v172 = vcvt.s32.f32 %v170
    %v173 = vpack.c.bf16 %v172, %v171
    %175 = vrot.lane.b32.xlu0 %v173, 64
    %v176 = vpop.permute.xlu0 %175
    %178 = vst.msk [vmem:[#allocation2 + $0x18] sm:$0xff] %vm81, %v176
    %179 = vset.pattern.permute.xlu0 8
    %180 = vperm.xlu0 %179, %v47
    %v181 = vpop.permute.xlu0 %180
    %182 = vset.pattern.permute.xlu0 8
    %183 = vperm.xlu0 %182, %v48
    %v184 = vpop.permute.xlu0 %183
    %vm185 = vcmp.eq.s32.totalorder %v181, %v45
    %vm186 = vcmp.eq.s32.totalorder %v184, %v45
    %v187 = vsel %vm185, 1, 0
    %v188 = vsel %vm186, 1, 0
    %v189 = vcvt.s32.f32 %v187
    %v190 = vcvt.s32.f32 %v188
    %v191 = vpack.c.bf16 %v190, %v189
    %192 = vst.msk [vmem:[#allocation2 + $0x20] sm:$0xff] %vm62, %v191
    %193 = vset.pattern.permute.xlu0 9
    %194 = vperm.xlu0 %193, %v47
    %v195 = vpop.permute.xlu0 %194
    %196 = vset.pattern.permute.xlu0 9
    %197 = vperm.xlu0 %196, %v48
    %v198 = vpop.permute.xlu0 %197
    %vm199 = vcmp.eq.s32.totalorder %v195, %v45
    %vm200 = vcmp.eq.s32.totalorder %v198, %v45
    %v201 = vsel %vm199, 1, 0
    %v202 = vsel %vm200, 1, 0
    %v203 = vcvt.s32.f32 %v201
    %v204 = vcvt.s32.f32 %v202
    %v205 = vpack.c.bf16 %v204, %v203
    %207 = vrot.lane.b32.xlu0 %v205, 64
    %v208 = vpop.permute.xlu0 %207
    %210 = vst.msk [vmem:[#allocation2 + $0x20] sm:$0xff] %vm81, %v208
    %211 = vset.pattern.permute.xlu0 10
    %212 = vperm.xlu0 %211, %v47
    %v213 = vpop.permute.xlu0 %212
    %214 = vset.pattern.permute.xlu0 10
    %215 = vperm.xlu0 %214, %v48
    %v216 = vpop.permute.xlu0 %215
    %vm217 = vcmp.eq.s32.totalorder %v213, %v45
    %vm218 = vcmp.eq.s32.totalorder %v216, %v45
    %v219 = vsel %vm217, 1, 0
    %v220 = vsel %vm218, 1, 0
    %v221 = vcvt.s32.f32 %v219
    %v222 = vcvt.s32.f32 %v220
    %v223 = vpack.c.bf16 %v222, %v221
    %224 = vst.msk [vmem:[#allocation2 + $0x28] sm:$0xff] %vm62, %v223
    %225 = vset.pattern.permute.xlu0 11
    %226 = vperm.xlu0 %225, %v47
    %v227 = vpop.permute.xlu0 %226
    %228 = vset.pattern.permute.xlu0 11
    %229 = vperm.xlu0 %228, %v48
    %v230 = vpop.permute.xlu0 %229
    %vm231 = vcmp.eq.s32.totalorder %v227, %v45
    %vm232 = vcmp.eq.s32.totalorder %v230, %v45
    %v233 = vsel %vm231, 1, 0
    %v234 = vsel %vm232, 1, 0
    %v235 = vcvt.s32.f32 %v233
    %v236 = vcvt.s32.f32 %v234
    %v237 = vpack.c.bf16 %v236, %v235
    %239 = vrot.lane.b32.xlu0 %v237, 64
    %v240 = vpop.permute.xlu0 %239
    %242 = vst.msk [vmem:[#allocation2 + $0x28] sm:$0xff] %vm81, %v240
    %243 = vset.pattern.permute.xlu0 12
    %244 = vperm.xlu0 %243, %v47
    %v245 = vpop.permute.xlu0 %244
    %246 = vset.pattern.permute.xlu0 12
    %247 = vperm.xlu0 %246, %v48
    %v248 = vpop.permute.xlu0 %247
    %vm249 = vcmp.eq.s32.totalorder %v245, %v45
    %vm250 = vcmp.eq.s32.totalorder %v248, %v45
    %v251 = vsel %vm249, 1, 0
    %v252 = vsel %vm250, 1, 0
    %v253 = vcvt.s32.f32 %v251
    %v254 = vcvt.s32.f32 %v252
    %v255 = vpack.c.bf16 %v254, %v253
    %256 = vst.msk [vmem:[#allocation2 + $0x30] sm:$0xff] %vm62, %v255
    %257 = vset.pattern.permute.xlu0 13
    %258 = vperm.xlu0 %257, %v47
    %v259 = vpop.permute.xlu0 %258
    %260 = vset.pattern.permute.xlu0 13
    %261 = vperm.xlu0 %260, %v48
    %v262 = vpop.permute.xlu0 %261
    %vm263 = vcmp.eq.s32.totalorder %v259, %v45
    %vm264 = vcmp.eq.s32.totalorder %v262, %v45
    %v265 = vsel %vm263, 1, 0
    %v266 = vsel %vm264, 1, 0
    %v267 = vcvt.s32.f32 %v265
    %v268 = vcvt.s32.f32 %v266
    %v269 = vpack.c.bf16 %v268, %v267
    %271 = vrot.lane.b32.xlu0 %v269, 64
    %v272 = vpop.permute.xlu0 %271
    %274 = vst.msk [vmem:[#allocation2 + $0x30] sm:$0xff] %vm81, %v272
    %275 = vset.pattern.permute.xlu0 14
    %276 = vperm.xlu0 %275, %v47
    %v277 = vpop.permute.xlu0 %276
    %278 = vset.pattern.permute.xlu0 14
    %279 = vperm.xlu0 %278, %v48
    %v280 = vpop.permute.xlu0 %279
    %vm281 = vcmp.eq.s32.totalorder %v277, %v45
    %vm282 = vcmp.eq.s32.totalorder %v280, %v45
    %v283 = vsel %vm281, 1, 0
    %v284 = vsel %vm282, 1, 0
    %v285 = vcvt.s32.f32 %v283
    %v286 = vcvt.s32.f32 %v284
    %v287 = vpack.c.bf16 %v286, %v285
    %288 = vst.msk [vmem:[#allocation2 + $0x38] sm:$0xff] %vm62, %v287
    %289 = vset.pattern.permute.xlu0 15
    %290 = vperm.xlu0 %289, %v47
    %v291 = vpop.permute.xlu0 %290
    %292 = vset.pattern.permute.xlu0 15
    %293 = vperm.xlu0 %292, %v48
    %v294 = vpop.permute.xlu0 %293
    %vm295 = vcmp.eq.s32.totalorder %v291, %v45
    %vm296 = vcmp.eq.s32.totalorder %v294, %v45
    %v297 = vsel %vm295, 1, 0
    %v298 = vsel %vm296, 1, 0
    %v299 = vcvt.s32.f32 %v297
    %v300 = vcvt.s32.f32 %v298
    %v301 = vpack.c.bf16 %v300, %v299
    %303 = vrot.lane.b32.xlu0 %v301, 64
    %v304 = vpop.permute.xlu0 %303
    %306 = vst.msk [vmem:[#allocation2 + $0x38] sm:$0xff] %vm81, %v304
    %v307 = vld [vmem:[#allocation6] sm:$0xf]
    %v308 = vld [vmem:[#allocation6 + $0x4] sm:$0xf]
    %v309 = vld [vmem:[#allocation6 + $0x8] sm:$0xf]
    %v310 = vld [vmem:[#allocation6 + $0xc] sm:$0xf]
    %v311 = vld [vmem:[#allocation6 + $0x10] sm:$0xf]
    %v312 = vld [vmem:[#allocation6 + $0x14] sm:$0xf]
    %v313 = vld [vmem:[#allocation6 + $0x18] sm:$0xf]
    %v314 = vld [vmem:[#allocation6 + $0x1c] sm:$0xf]
    %v315 = vld [vmem:[#allocation6 + $0x20] sm:$0xf]
    %v316 = vld [vmem:[#allocation6 + $0x24] sm:$0xf]
    %v317 = vld [vmem:[#allocation6 + $0x28] sm:$0xf]
    %v318 = vld [vmem:[#allocation6 + $0x2c] sm:$0xf]
    %v319 = vld [vmem:[#allocation6 + $0x30] sm:$0xf]
    %v320 = vld [vmem:[#allocation6 + $0x34] sm:$0xf]
    %v321 = vld [vmem:[#allocation6 + $0x38] sm:$0xf]
    %v322 = vld [vmem:[#allocation6 + $0x3c] sm:$0xf]
    %v323 = vld [vmem:[#allocation6 + $0x40] sm:$0xf]
    %v324 = vld [vmem:[#allocation6 + $0x44] sm:$0xf]
    %v325 = vld [vmem:[#allocation6 + $0x48] sm:$0xf]
    %v326 = vld [vmem:[#allocation6 + $0x4c] sm:$0xf]
    %v327 = vld [vmem:[#allocation6 + $0x50] sm:$0xf]
    %v328 = vld [vmem:[#allocation6 + $0x54] sm:$0xf]
    %v329 = vld [vmem:[#allocation6 + $0x58] sm:$0xf]
    %v330 = vld [vmem:[#allocation6 + $0x5c] sm:$0xf]
    %v331 = vld [vmem:[#allocation6 + $0x60] sm:$0xf]
    %v332 = vld [vmem:[#allocation6 + $0x64] sm:$0xf]
    %v333 = vld [vmem:[#allocation6 + $0x68] sm:$0xf]
    %v334 = vld [vmem:[#allocation6 + $0x6c] sm:$0xf]
    %v335 = vld [vmem:[#allocation6 + $0x70] sm:$0xf]
    %v336 = vld [vmem:[#allocation6 + $0x74] sm:$0xf]
    %v337 = vld [vmem:[#allocation6 + $0x78] sm:$0xf]
    %v338 = vld [vmem:[#allocation6 + $0x7c] sm:$0xf]
    %v339 = vld [vmem:[#allocation2] sm:$0xff]
    %v340 = vld [vmem:[#allocation2 + $0x8] sm:$0xff]
    %v373 = vunpack.c.l.b16 %v307
    %v374 = vunpack.c.l.b16 %v308
    %v375 = vunpack.c.l.b16 %v309
    %v376 = vunpack.c.l.b16 %v310
    %v377 = vunpack.c.l.b16 %v311
    %v378 = vunpack.c.l.b16 %v312
    %v379 = vunpack.c.l.b16 %v313
    %v380 = vunpack.c.l.b16 %v314
    %v381 = vunpack.c.l.b16 %v315
    %v382 = vunpack.c.l.b16 %v316
    %v383 = vunpack.c.l.b16 %v317
    %v384 = vunpack.c.l.b16 %v318
    %v385 = vunpack.c.l.b16 %v319
    %v386 = vunpack.c.l.b16 %v320
    %v387 = vunpack.c.l.b16 %v321
    %v388 = vunpack.c.l.b16 %v322
    %v389 = vunpack.c.l.b16 %v323
    %v390 = vunpack.c.l.b16 %v324
    %v391 = vunpack.c.l.b16 %v325
    %v392 = vunpack.c.l.b16 %v326
    %v393 = vunpack.c.l.b16 %v327
    %v394 = vunpack.c.l.b16 %v328
    %v395 = vunpack.c.l.b16 %v329
    %v396 = vunpack.c.l.b16 %v330
    %v397 = vunpack.c.l.b16 %v331
    %v398 = vunpack.c.l.b16 %v332
    %v399 = vunpack.c.l.b16 %v333
    %v400 = vunpack.c.l.b16 %v334
    %v401 = vunpack.c.l.b16 %v335
    %v402 = vunpack.c.l.b16 %v336
    %v403 = vunpack.c.l.b16 %v337
    %v404 = vunpack.c.l.b16 %v338
    %v405 = vpack.c.b16 %v374, %v373
    %v406 = vpack.c.b16 %v376, %v375
    %v407 = vpack.c.b16 %v378, %v377
    %v408 = vpack.c.b16 %v380, %v379
    %v409 = vpack.c.b16 %v382, %v381
    %v410 = vpack.c.b16 %v384, %v383
    %v411 = vpack.c.b16 %v386, %v385
    %v412 = vpack.c.b16 %v388, %v387
    %v413 = vpack.c.b16 %v390, %v389
    %v414 = vpack.c.b16 %v392, %v391
    %v415 = vpack.c.b16 %v394, %v393
    %v416 = vpack.c.b16 %v396, %v395
    %v417 = vpack.c.b16 %v398, %v397
    %v418 = vpack.c.b16 %v400, %v399
    %v419 = vpack.c.b16 %v402, %v401
    %v420 = vpack.c.b16 %v404, %v403
    %437 = vmatprep.subr.bf16.mxu0 0
    %438 = vmatpush1.bf16.msra.mxu0 %v405
    %439 = vmatprep.subr.bf16.mxu0 0
    %440 = vmatpush1.bf16.msra.mxu0 %v406
    %441 = vmatprep.subr.bf16.mxu0 0
    %442 = vmatpush1.bf16.msra.mxu0 %v407
    %443 = vmatprep.subr.bf16.mxu0 0
    %444 = vmatpush1.bf16.msra.mxu0 %v408
    %445 = vmatprep.subr.bf16.mxu0 0
    %446 = vmatpush1.bf16.msra.mxu0 %v409
    %447 = vmatprep.subr.bf16.mxu0 0
    %448 = vmatpush1.bf16.msra.mxu0 %v410
    %449 = vmatprep.subr.bf16.mxu0 0
    %450 = vmatpush1.bf16.msra.mxu0 %v411
    %451 = vmatprep.subr.bf16.mxu0 0
    %452 = vmatpush1.bf16.msra.mxu0 %v412
    %453 = vmatprep.subr.bf16.mxu0 0
    %454 = vmatpush1.bf16.msra.mxu0 %v413
    %455 = vmatprep.subr.bf16.mxu0 0
    %456 = vmatpush1.bf16.msra.mxu0 %v414
    %457 = vmatprep.subr.bf16.mxu0 0
    %458 = vmatpush1.bf16.msra.mxu0 %v415
    %459 = vmatprep.subr.bf16.mxu0 0
    %460 = vmatpush1.bf16.msra.mxu0 %v416
    %461 = vmatprep.subr.bf16.mxu0 0
    %462 = vmatpush1.bf16.msra.mxu0 %v417
    %463 = vmatprep.subr.bf16.mxu0 0
    %464 = vmatpush1.bf16.msra.mxu0 %v418
    %465 = vmatprep.subr.bf16.mxu0 0
    %466 = vmatpush1.bf16.msra.mxu0 %v419
    %467 = vmatprep.subr.bf16.mxu0 0
    %468 = vmatpush1.bf16.msra.mxu0 %v420
    %469 = vmatprep.mubr.bf16.mxu0 %v340
    %470 = vmatmul.mubr.bf16.gmra.mrb[0].mxu0 %v339
    %v471 = vpop.f32.mrb[0].mxu0
    %v472 = vadd.f32 0.0, %v471
    %v473 = vpop.f32.mrb[0].mxu0
    %v474 = vpop.f32.mrb[0].mxu0
    %v475 = vadd.f32 0.0, %v474
    %v476 = vpop.f32.mrb[0].mxu0
    %477 = vdwg.mxu0
    %v478 = vld [vmem:[#allocation2 + $0x8] sm:$0xff]
    %v479 = vld [vmem:[#allocation2 + $0x10] sm:$0xff]
    %480 = vmatprep.subr.bf16.mxu0 0
    %481 = vmatpush1.bf16.msra.mxu0 %v405
    %482 = vmatprep.subr.bf16.mxu0 0
    %483 = vmatpush1.bf16.msra.mxu0 %v406
    %484 = vmatprep.subr.bf16.mxu0 0
    %485 = vmatpush1.bf16.msra.mxu0 %v407
    %486 = vmatprep.subr.bf16.mxu0 0
    %487 = vmatpush1.bf16.msra.mxu0 %v408
    %488 = vmatprep.subr.bf16.mxu0 0
    %489 = vmatpush1.bf16.msra.mxu0 %v409
    %490 = vmatprep.subr.bf16.mxu0 0
    %491 = vmatpush1.bf16.msra.mxu0 %v410
    %492 = vmatprep.subr.bf16.mxu0 0
    %493 = vmatpush1.bf16.msra.mxu0 %v411
    %494 = vmatprep.subr.bf16.mxu0 0
    %495 = vmatpush1.bf16.msra.mxu0 %v412
    %496 = vmatprep.subr.bf16.mxu0 0
    %497 = vmatpush1.bf16.msra.mxu0 %v413
    %498 = vmatprep.subr.bf16.mxu0 0
    %499 = vmatpush1.bf16.msra.mxu0 %v414
    %500 = vmatprep.subr.bf16.mxu0 0
    %501 = vmatpush1.bf16.msra.mxu0 %v415
    %502 = vmatprep.subr.bf16.mxu0 0
    %503 = vmatpush1.bf16.msra.mxu0 %v416
    %504 = vmatprep.subr.bf16.mxu0 0
    %505 = vmatpush1.bf16.msra.mxu0 %v417
    %506 = vmatprep.subr.bf16.mxu0 0
    %507 = vmatpush1.bf16.msra.mxu0 %v418
    %508 = vmatprep.subr.bf16.mxu0 0
    %509 = vmatpush1.bf16.msra.mxu0 %v419
    %510 = vmatprep.subr.bf16.mxu0 0
    %511 = vmatpush1.bf16.msra.mxu0 %v420
    %512 = vmatprep.mubr.bf16.mxu0 %v479
    %513 = vmatmul.mubr.bf16.gmra.mrb[0].mxu0 %v478
    %v514 = vpop.f32.mrb[0].mxu0
    %v515 = vadd.f32 0.0, %v514
    %v516 = vpop.f32.mrb[0].mxu0
    %v517 = vpop.f32.mrb[0].mxu0
    %v518 = vadd.f32 0.0, %v517
    %v519 = vpop.f32.mrb[0].mxu0
    %520 = vdwg.mxu0
    %v521 = vmax.f32 %v472, %v515
    %v522 = vmax.f32 %v475, %v518
    %v523 = vld [vmem:[#allocation2 + $0x10] sm:$0xff]
    %v524 = vld [vmem:[#allocation2 + $0x18] sm:$0xff]
    %525 = vmatprep.subr.bf16.mxu0 0
    %526 = vmatpush1.bf16.msra.mxu0 %v405
    %527 = vmatprep.subr.bf16.mxu0 0
    %528 = vmatpush1.bf16.msra.mxu0 %v406
    %529 = vmatprep.subr.bf16.mxu0 0
    %530 = vmatpush1.bf16.msra.mxu0 %v407
    %531 = vmatprep.subr.bf16.mxu0 0
    %532 = vmatpush1.bf16.msra.mxu0 %v408
    %533 = vmatprep.subr.bf16.mxu0 0
    %534 = vmatpush1.bf16.msra.mxu0 %v409
    %535 = vmatprep.subr.bf16.mxu0 0
    %536 = vmatpush1.bf16.msra.mxu0 %v410
    %537 = vmatprep.subr.bf16.mxu0 0
    %538 = vmatpush1.bf16.msra.mxu0 %v411
    %539 = vmatprep.subr.bf16.mxu0 0
    %540 = vmatpush1.bf16.msra.mxu0 %v412
    %541 = vmatprep.subr.bf16.mxu0 0
    %542 = vmatpush1.bf16.msra.mxu0 %v413
    %543 = vmatprep.subr.bf16.mxu0 0
    %544 = vmatpush1.bf16.msra.mxu0 %v414
    %545 = vmatprep.subr.bf16.mxu0 0
    %546 = vmatpush1.bf16.msra.mxu0 %v415
    %547 = vmatprep.subr.bf16.mxu0 0
    %548 = vmatpush1.bf16.msra.mxu0 %v416
    %549 = vmatprep.subr.bf16.mxu0 0
    %550 = vmatpush1.bf16.msra.mxu0 %v417
    %551 = vmatprep.subr.bf16.mxu0 0
    %552 = vmatpush1.bf16.msra.mxu0 %v418
    %553 = vmatprep.subr.bf16.mxu0 0
    %554 = vmatpush1.bf16.msra.mxu0 %v419
    %555 = vmatprep.subr.bf16.mxu0 0
    %556 = vmatpush1.bf16.msra.mxu0 %v420
    %557 = vmatprep.mubr.bf16.mxu0 %v524
    %558 = vmatmul.mubr.bf16.gmra.mrb[0].mxu0 %v523
    %v559 = vpop.f32.mrb[0].mxu0
    %v560 = vadd.f32 0.0, %v559
    %v561 = vpop.f32.mrb[0].mxu0
    %v562 = vpop.f32.mrb[0].mxu0
    %v563 = vadd.f32 0.0, %v562
    %v564 = vpop.f32.mrb[0].mxu0
    %565 = vdwg.mxu0
    %v566 = vmax.f32 %v521, %v560
    %v567 = vmax.f32 %v522, %v563
    %v568 = vld [vmem:[#allocation2 + $0x18] sm:$0xff]
    %v569 = vld [vmem:[#allocation2 + $0x20] sm:$0xff]
    %570 = vmatprep.subr.bf16.mxu0 0
    %571 = vmatpush1.bf16.msra.mxu0 %v405
    %572 = vmatprep.subr.bf16.mxu0 0
    %573 = vmatpush1.bf16.msra.mxu0 %v406
    %574 = vmatprep.subr.bf16.mxu0 0
    %575 = vmatpush1.bf16.msra.mxu0 %v407
    %576 = vmatprep.subr.bf16.mxu0 0
    %577 = vmatpush1.bf16.msra.mxu0 %v408
    %578 = vmatprep.subr.bf16.mxu0 0
    %579 = vmatpush1.bf16.msra.mxu0 %v409
    %580 = vmatprep.subr.bf16.mxu0 0
    %581 = vmatpush1.bf16.msra.mxu0 %v410
    %582 = vmatprep.subr.bf16.mxu0 0
    %583 = vmatpush1.bf16.msra.mxu0 %v411
    %584 = vmatprep.subr.bf16.mxu0 0
    %585 = vmatpush1.bf16.msra.mxu0 %v412
    %586 = vmatprep.subr.bf16.mxu0 0
    %587 = vmatpush1.bf16.msra.mxu0 %v413
    %588 = vmatprep.subr.bf16.mxu0 0
    %589 = vmatpush1.bf16.msra.mxu0 %v414
    %590 = vmatprep.subr.bf16.mxu0 0
    %591 = vmatpush1.bf16.msra.mxu0 %v415
    %592 = vmatprep.subr.bf16.mxu0 0
    %593 = vmatpush1.bf16.msra.mxu0 %v416
    %594 = vmatprep.subr.bf16.mxu0 0
    %595 = vmatpush1.bf16.msra.mxu0 %v417
    %596 = vmatprep.subr.bf16.mxu0 0
    %597 = vmatpush1.bf16.msra.mxu0 %v418
    %598 = vmatprep.subr.bf16.mxu0 0
    %599 = vmatpush1.bf16.msra.mxu0 %v419
    %600 = vmatprep.subr.bf16.mxu0 0
    %601 = vmatpush1.bf16.msra.mxu0 %v420
    %602 = vmatprep.mubr.bf16.mxu0 %v569
    %603 = vmatmul.mubr.bf16.gmra.mrb[0].mxu0 %v568
    %v604 = vpop.f32.mrb[0].mxu0
    %v605 = vadd.f32 0.0, %v604
    %v606 = vpop.f32.mrb[0].mxu0
    %v607 = vpop.f32.mrb[0].mxu0
    %v608 = vadd.f32 0.0, %v607
    %v609 = vpop.f32.mrb[0].mxu0
    %610 = vdwg.mxu0
    %v611 = vmax.f32 %v566, %v605
    %v612 = vmax.f32 %v567, %v608
    %v613 = vld [vmem:[#allocation2 + $0x20] sm:$0xff]
    %v614 = vld [vmem:[#allocation2 + $0x28] sm:$0xff]
    %615 = vmatprep.subr.bf16.mxu0 0
    %616 = vmatpush1.bf16.msra.mxu0 %v405
    %617 = vmatprep.subr.bf16.mxu0 0
    %618 = vmatpush1.bf16.msra.mxu0 %v406
    %619 = vmatprep.subr.bf16.mxu0 0
    %620 = vmatpush1.bf16.msra.mxu0 %v407
    %621 = vmatprep.subr.bf16.mxu0 0
    %622 = vmatpush1.bf16.msra.mxu0 %v408
    %623 = vmatprep.subr.bf16.mxu0 0
    %624 = vmatpush1.bf16.msra.mxu0 %v409
    %625 = vmatprep.subr.bf16.mxu0 0
    %626 = vmatpush1.bf16.msra.mxu0 %v410
    %627 = vmatprep.subr.bf16.mxu0 0
    %628 = vmatpush1.bf16.msra.mxu0 %v411
    %629 = vmatprep.subr.bf16.mxu0 0
    %630 = vmatpush1.bf16.msra.mxu0 %v412
    %631 = vmatprep.subr.bf16.mxu0 0
    %632 = vmatpush1.bf16.msra.mxu0 %v413
    %633 = vmatprep.subr.bf16.mxu0 0
    %634 = vmatpush1.bf16.msra.mxu0 %v414
    %635 = vmatprep.subr.bf16.mxu0 0
    %636 = vmatpush1.bf16.msra.mxu0 %v415
    %637 = vmatprep.subr.bf16.mxu0 0
    %638 = vmatpush1.bf16.msra.mxu0 %v416
    %639 = vmatprep.subr.bf16.mxu0 0
    %640 = vmatpush1.bf16.msra.mxu0 %v417
    %641 = vmatprep.subr.bf16.mxu0 0
    %642 = vmatpush1.bf16.msra.mxu0 %v418
    %643 = vmatprep.subr.bf16.mxu0 0
    %644 = vmatpush1.bf16.msra.mxu0 %v419
    %645 = vmatprep.subr.bf16.mxu0 0
    %646 = vmatpush1.bf16.msra.mxu0 %v420
    %647 = vmatprep.mubr.bf16.mxu0 %v614
    %648 = vmatmul.mubr.bf16.gmra.mrb[0].mxu0 %v613
    %v649 = vpop.f32.mrb[0].mxu0
    %v650 = vadd.f32 0.0, %v649
    %v651 = vpop.f32.mrb[0].mxu0
    %v652 = vpop.f32.mrb[0].mxu0
    %v653 = vadd.f32 0.0, %v652
    %v654 = vpop.f32.mrb[0].mxu0
    %655 = vdwg.mxu0
    %v656 = vmax.f32 %v611, %v650
    %v657 = vmax.f32 %v612, %v653
    %v658 = vld [vmem:[#allocation2 + $0x28] sm:$0xff]
    %v659 = vld [vmem:[#allocation2 + $0x30] sm:$0xff]
    %660 = vmatprep.subr.bf16.mxu0 0
    %661 = vmatpush1.bf16.msra.mxu0 %v405
    %662 = vmatprep.subr.bf16.mxu0 0
    %663 = vmatpush1.bf16.msra.mxu0 %v406
    %664 = vmatprep.subr.bf16.mxu0 0
    %665 = vmatpush1.bf16.msra.mxu0 %v407
    %666 = vmatprep.subr.bf16.mxu0 0
    %667 = vmatpush1.bf16.msra.mxu0 %v408
    %668 = vmatprep.subr.bf16.mxu0 0
    %669 = vmatpush1.bf16.msra.mxu0 %v409
    %670 = vmatprep.subr.bf16.mxu0 0
    %671 = vmatpush1.bf16.msra.mxu0 %v410
    %672 = vmatprep.subr.bf16.mxu0 0
    %673 = vmatpush1.bf16.msra.mxu0 %v411
    %674 = vmatprep.subr.bf16.mxu0 0
    %675 = vmatpush1.bf16.msra.mxu0 %v412
    %676 = vmatprep.subr.bf16.mxu0 0
    %677 = vmatpush1.bf16.msra.mxu0 %v413
    %678 = vmatprep.subr.bf16.mxu0 0
    %679 = vmatpush1.bf16.msra.mxu0 %v414
    %680 = vmatprep.subr.bf16.mxu0 0
    %681 = vmatpush1.bf16.msra.mxu0 %v415
    %682 = vmatprep.subr.bf16.mxu0 0
    %683 = vmatpush1.bf16.msra.mxu0 %v416
    %684 = vmatprep.subr.bf16.mxu0 0
    %685 = vmatpush1.bf16.msra.mxu0 %v417
    %686 = vmatprep.subr.bf16.mxu0 0
    %687 = vmatpush1.bf16.msra.mxu0 %v418
    %688 = vmatprep.subr.bf16.mxu0 0
    %689 = vmatpush1.bf16.msra.mxu0 %v419
    %690 = vmatprep.subr.bf16.mxu0 0
    %691 = vmatpush1.bf16.msra.mxu0 %v420
    %692 = vmatprep.mubr.bf16.mxu0 %v659
    %693 = vmatmul.mubr.bf16.gmra.mrb[0].mxu0 %v658
    %v694 = vpop.f32.mrb[0].mxu0
    %v695 = vadd.f32 0.0, %v694
    %v696 = vpop.f32.mrb[0].mxu0
    %v697 = vpop.f32.mrb[0].mxu0
    %v698 = vadd.f32 0.0, %v697
    %v699 = vpop.f32.mrb[0].mxu0
    %700 = vdwg.mxu0
    %v701 = vmax.f32 %v656, %v695
    %v702 = vmax.f32 %v657, %v698
    %v703 = vld [vmem:[#allocation2 + $0x30] sm:$0xff]
    %v704 = vld [vmem:[#allocation2 + $0x38] sm:$0xff]
    %705 = vmatprep.subr.bf16.mxu0 0
    %706 = vmatpush1.bf16.msra.mxu0 %v405
    %707 = vmatprep.subr.bf16.mxu0 0
    %708 = vmatpush1.bf16.msra.mxu0 %v406
    %709 = vmatprep.subr.bf16.mxu0 0
    %710 = vmatpush1.bf16.msra.mxu0 %v407
    %711 = vmatprep.subr.bf16.mxu0 0
    %712 = vmatpush1.bf16.msra.mxu0 %v408
    %713 = vmatprep.subr.bf16.mxu0 0
    %714 = vmatpush1.bf16.msra.mxu0 %v409
    %715 = vmatprep.subr.bf16.mxu0 0
    %716 = vmatpush1.bf16.msra.mxu0 %v410
    %717 = vmatprep.subr.bf16.mxu0 0
    %718 = vmatpush1.bf16.msra.mxu0 %v411
    %719 = vmatprep.subr.bf16.mxu0 0
    %720 = vmatpush1.bf16.msra.mxu0 %v412
    %721 = vmatprep.subr.bf16.mxu0 0
    %722 = vmatpush1.bf16.msra.mxu0 %v413
    %723 = vmatprep.subr.bf16.mxu0 0
    %724 = vmatpush1.bf16.msra.mxu0 %v414
    %725 = vmatprep.subr.bf16.mxu0 0
    %726 = vmatpush1.bf16.msra.mxu0 %v415
    %727 = vmatprep.subr.bf16.mxu0 0
    %728 = vmatpush1.bf16.msra.mxu0 %v416
    %729 = vmatprep.subr.bf16.mxu0 0
    %730 = vmatpush1.bf16.msra.mxu0 %v417
    %731 = vmatprep.subr.bf16.mxu0 0
    %732 = vmatpush1.bf16.msra.mxu0 %v418
    %733 = vmatprep.subr.bf16.mxu0 0
    %734 = vmatpush1.bf16.msra.mxu0 %v419
    %735 = vmatprep.subr.bf16.mxu0 0
    %736 = vmatpush1.bf16.msra.mxu0 %v420
    %737 = vmatprep.mubr.bf16.mxu0 %v704
    %738 = vmatmul.mubr.bf16.gmra.mrb[0].mxu0 %v703
    %v739 = vpop.f32.mrb[0].mxu0
    %v740 = vadd.f32 0.0, %v739
    %v741 = vpop.f32.mrb[0].mxu0
    %v742 = vpop.f32.mrb[0].mxu0
    %v743 = vadd.f32 0.0, %v742
    %v744 = vpop.f32.mrb[0].mxu0
    %745 = vdwg.mxu0
    %v746 = vmax.f32 %v701, %v740
    %v747 = vmax.f32 %v702, %v743
    %750 = vrot.lane.b32.xlu0 %v746, 64
    %v751 = vpop.permute.xlu0 %750
    %752 = vrot.lane.b32.xlu0 %v747, 64
    %v753 = vpop.permute.xlu0 %752
    %v756 = vmax.f32 %v746, %v751
    %v757 = vmax.f32 %v747, %v753
    %v759 = vlaneseq
    %v760 = vshrl.u32 %v759, 7
    %v761 = vsub.s32 0, %v760
    %v762 = vrot.slane %v46, %v761
    %v764 = vadd.f32 %v756, %v762
    %v765 = vadd.f32 %v757, %v762
    %v766 = vmax.f32 %v764, 0.0
    %v767 = vmax.f32 %v765, 0.0
    %768 = vst.msk [vmem:[#allocation8] sm:$0xff] %vm62, %v766
    %769 = vst.msk [vmem:[#allocation8 + $0x8] sm:$0xff] %vm62, %v767
    // Predicated region
    $region22: #{tpu_custom_call.1} parent=1 // pred_check
      _
    $region23: #{tpu_custom_call.1} parent=1 // pred_check_branch
      %771 = sbr.rel (0) target = $region25
    $region24: #{tpu_custom_call.1} parent=1 // pred_region
      %s773 = ssub.s32 256, 256
      %774 = vsyncadd [#allocation5], %s773
      %s775 = sshll.u32 [#allocation8], 4
      %s776 = int_to_ptr.vmem [resolvable:$true] %s775
      %781 = dma.vmem_to_hbm [thread:$0]  %s776, 256, %s3, [#allocation5], 128, 128, 8
    $region25: #{tpu_custom_call.1} parent=1 // pred_fallthru
      _
    // Predicated region
    $region26: #{tpu_custom_call.1} parent=1 // pred_check
      _
    $region27: #{tpu_custom_call.1} parent=1 // pred_check_branch
      %783 = sbr.rel (0) target = $region29
    $region28: #{tpu_custom_call.1} parent=1 // pred_region
      %784 = dma.done [#allocation5], 256
    $region29: #{tpu_custom_call.1} parent=1 // pred_fallthru
      _
    %785 = vsyncpa [#allocation4], 1
    %786 = vsyncpa [#allocation7], 1
    %787 = vsyncpa [#allocation5], 1

</llo_original>
